<compile_context>
chip_gen: v7x
topology: tpu7x:2x2x1
jax: 0.10.0
libtpu: 0.0.40
codegen_flags: <defaults>
</compile_context>

<pallas_src>
import functools

import jax
import jax.numpy as jnp
from jax import lax
from jax.experimental import pallas as pl
from jax.experimental.pallas import tpu as pltpu


def _sdpa_kernel(q_ref, k_ref, v_ref, out_ref, attn_ref, log_attn_ref, *,
                 inv_temperature, lk_valid, lk_total):
    # q_ref: (1, TQ, D)   k_ref: (1, Lk_pad, D)   v_ref: (1, Lk_pad, Dv)

    # Fold 1/temperature into q: TQ x D multiplies instead of TQ x Lk.
    # Scale in f32 after load, then cast back to the native MXU input dtype.
    q = (q_ref[0].astype(jnp.float32) * inv_temperature).astype(q_ref.dtype)
    k = k_ref[0]
    v = v_ref[0]

    # scores = q . k^T: last-dim/last-dim contraction straight on the MXU
    # (no XLU transpose of k).                                (TQ, Lk_pad) f32
    scores = lax.dot_general(
        q, k,
        dimension_numbers=(((1,), (1,)), ((), ())),
        preferred_element_type=jnp.float32,
    )

    if lk_valid < lk_total:
        # Static branch: mask zero-padded key columns so no softmax mass
        # leaks into the padding.
        key_idx = lax.broadcasted_iota(jnp.int32, scores.shape, 1)
        scores = jnp.where(key_idx < lk_valid, scores, -1e30)

    # Numerically stable softmax / log-softmax over the key axis.
    # Single exp pass; attn via a per-row reciprocal instead of a second exp.
    m = jnp.max(scores, axis=-1, keepdims=True)
    shifted = scores - m
    e = jnp.exp(shifted)                               # EUP, once
    s = jnp.sum(e, axis=-1, keepdims=True)
    attn = e * (1.0 / s)                               # softmax
    log_attn = shifted - jnp.log(s)                    # log_softmax

    # dropout: identity (eval mode)

    # output = attn @ v                                       (TQ, Dv) -- MXU
    out = jnp.dot(attn.astype(v.dtype), v, preferred_element_type=jnp.float32)

    out_ref[0] = out.astype(out_ref.dtype)
    attn_ref[0] = attn.astype(attn_ref.dtype)
    log_attn_ref[0] = log_attn.astype(log_attn_ref.dtype)


def _round_up(x, m):
    return ((x + m - 1) // m) * m


def _vmem_budget_bytes():
    """Generation-aware VMEM budget (~3/4 of physical, capped)."""
    cap = None
    try:
        info = pltpu.get_tpu_info()
        cap = getattr(info, "vmem_capacity_bytes", None)
    except Exception:
        cap = None
    if not cap:
        cap = 64 * 1024 * 1024   # conservative: v7x has the smallest VMEM
    return int(min(cap * 3 // 4, 96 * 1024 * 1024))


def _pick_tq(lq, lk_pad, d, dv, itemsize, budget):
    """Pick the query tile so the full per-step footprint fits `budget`."""
    # Per-grid-step VMEM:
    #   fixed : double-buffered k and v blocks (index_map constant in qi)
    #   per_tq: double-buffered q/out blocks, attn + log_attn output blocks,
    #           plus ~4 f32 (TQ, Lk) in-kernel temporaries (scores/shifted/e/attn)
    fixed = 2 * lk_pad * (d + dv) * itemsize
    per_tq = 2 * (d + dv + 2 * lk_pad) * itemsize + 4 * lk_pad * 4
    avail = max(budget - fixed, 0)
    tq_max = avail // max(per_tq, 1)
    tq_max = max(8, min(512, (tq_max // 8) * 8))

    lq_pad8 = _round_up(lq, 8)
    tq_cap = min(tq_max, lq_pad8)

    if lq % 8 == 0:
        # Prefer a divisor of Lq: avoids padding q and slicing all 3 outputs.
        for cand in range(tq_cap, 7, -8):
            if lq % cand == 0:
                if 2 * cand >= tq_cap:   # only if the tile stays reasonably big
                    return cand, lq
                break
    tq = tq_cap
    return tq, _round_up(lq, tq)


def scaled_dot_product_attention(q, k, v, temperature):
    B, Lq, D = q.shape
    Bk, Lk, Dk = k.shape
    Bv, Lv, Dv = v.shape
    assert Dk == D and Lv == Lk and Bk == B and Bv == B

    out_dtype = q.dtype
    itemsize = jnp.dtype(out_dtype).itemsize

    # Pad the key axis to a multiple of 128 -> lane-dense attn/log_attn stores
    # and 128-aligned MXU dims.  Pad keys are masked to -inf-like in-kernel.
    lk_pad = _round_up(Lk, 128)

    budget = _vmem_budget_bytes()
    tq, lq_pad = _pick_tq(Lq, lk_pad, D, Dv, itemsize, budget)

    if lq_pad != Lq:
        q = jnp.pad(q, ((0, 0), (0, lq_pad - Lq), (0, 0)))
    if lk_pad != Lk:
        k = jnp.pad(k, ((0, 0), (0, lk_pad - Lk), (0, 0)))
        v = jnp.pad(v, ((0, 0), (0, lk_pad - Lk), (0, 0)))

    kernel = functools.partial(
        _sdpa_kernel,
        inv_temperature=1.0 / float(temperature),
        lk_valid=Lk,
        lk_total=lk_pad,
    )

    out_shapes = (
        jax.ShapeDtypeStruct((B, lq_pad, Dv), out_dtype),      # output
        jax.ShapeDtypeStruct((B, lq_pad, lk_pad), out_dtype),  # attn
        jax.ShapeDtypeStruct((B, lq_pad, lk_pad), out_dtype),  # log_attn
    )

    out, attn, log_attn = pl.pallas_call(
        kernel,
        out_shape=out_shapes,
        grid_spec=pltpu.PrefetchScalarGridSpec(
            num_scalar_prefetch=0,
            grid=(B, lq_pad // tq),
            in_specs=[
                pl.BlockSpec((1, tq, D), lambda b, qi: (b, qi, 0)),
                pl.BlockSpec((1, lk_pad, D), lambda b, qi: (b, 0, 0)),
                pl.BlockSpec((1, lk_pad, Dv), lambda b, qi: (b, 0, 0)),
            ],
            out_specs=[
                pl.BlockSpec((1, tq, Dv), lambda b, qi: (b, qi, 0)),
                pl.BlockSpec((1, tq, lk_pad), lambda b, qi: (b, qi, 0)),
                pl.BlockSpec((1, tq, lk_pad), lambda b, qi: (b, qi, 0)),
            ],
        ),
        compiler_params=pltpu.CompilerParams(
            dimension_semantics=("parallel", "parallel"),
            vmem_limit_bytes=budget,
        ),
    )(q, k, v)

    if lq_pad != Lq:
        out = out[:, :Lq]
        attn = attn[:, :Lq]
        log_attn = log_attn[:, :Lq]
    if lk_pad != Lk:
        attn = attn[:, :, :Lk]
        log_attn = log_attn[:, :, :Lk]
    return out, attn, log_attn


def _reference(q, k, v, temperature):
    attn = jnp.einsum("bqd,bkd->bqk", q, k) / temperature
    m = jnp.max(attn, axis=-1, keepdims=True)
    e = jnp.exp(attn - m)
    s = jnp.sum(e, axis=-1, keepdims=True)
    sm = e / s
    log_sm = (attn - m) - jnp.log(s)
    out = jnp.einsum("bqk,bkd->bqd", sm, v)
    return out, sm, log_sm


if __name__ == "__main__":
    # Small deterministic inputs: batch=2, seq=8, hidden=32
    B, L, D = 2, 8, 32
    temperature = float(jnp.sqrt(jnp.float32(D)))

    key = jax.random.PRNGKey(0)
    kq, kk, kv = jax.random.split(key, 3)
    q = jax.random.normal(kq, (B, L, D), dtype=jnp.float32)
    k = jax.random.normal(kk, (B, L, D), dtype=jnp.float32)
    v = jax.random.normal(kv, (B, L, D), dtype=jnp.float32)

    out, attn, log_attn = scaled_dot_product_attention(q, k, v, temperature)
    jax.block_until_ready((out, attn, log_attn))

    ref_out, ref_attn, ref_log_attn = _reference(q, k, v, temperature)
    assert jnp.allclose(out, ref_out, atol=1e-4, rtol=1e-4)
    assert jnp.allclose(attn, ref_attn, atol=1e-4, rtol=1e-4)
    assert jnp.allclose(log_attn, ref_log_attn, atol=1e-4, rtol=1e-4)

    print("KERNEL_OK")
</pallas_src>

<mosaic_0001>
module attributes {stable_mosaic.version = 11 : i64} {
  func.func @_sdpa_kernel(%arg0: i32, %arg1: i32, %arg2: memref<1x8x32xf32, #tpu.memory_space<vmem>>, %arg3: memref<1x128x32xf32, #tpu.memory_space<vmem>>, %arg4: memref<1x128x32xf32, #tpu.memory_space<vmem>>, %arg5: memref<1x8x32xf32, #tpu.memory_space<vmem>>, %arg6: memref<1x8x128xf32, #tpu.memory_space<vmem>>, %arg7: memref<1x8x128xf32, #tpu.memory_space<vmem>>) attributes {dimension_semantics = [#tpu.dimension_semantics<parallel>, #tpu.dimension_semantics<parallel>], iteration_bounds = array<i64: 2, 1>, scalar_prefetch = 0 : i64, scratch_operands = 0 : i64, tpu.core_type = #tpu.core_type<tc>, window_params = [{transform_indices = @transform_0, window_bounds = array<i64: 1, 8, 32>}, {transform_indices = @transform_1, window_bounds = array<i64: 1, 128, 32>}, {transform_indices = @transform_2, window_bounds = array<i64: 1, 128, 32>}, {transform_indices = @transform_3, window_bounds = array<i64: 1, 8, 32>}, {transform_indices = @transform_4, window_bounds = array<i64: 1, 8, 128>}, {transform_indices = @transform_5, window_bounds = array<i64: 1, 8, 128>}]} {
    %c0 = arith.constant 0 : index
    %c0_0 = arith.constant 0 : index
    %c0_1 = arith.constant 0 : index
    %0 = vector.load %arg2[%c0, %c0_0, %c0_1] : memref<1x8x32xf32, #tpu.memory_space<vmem>>, vector<1x8x32xf32>
    %1 = vector.shape_cast %0 : vector<1x8x32xf32> to vector<8x32xf32>
    %cst = arith.constant 0.176776692 : f32
    %2 = vector.broadcast %cst : f32 to vector<8x32xf32>
    %3 = arith.mulf %1, %2 : vector<8x32xf32>
    %c0_2 = arith.constant 0 : index
    %c0_3 = arith.constant 0 : index
    %c0_4 = arith.constant 0 : index
    %4 = vector.load %arg3[%c0_2, %c0_3, %c0_4] : memref<1x128x32xf32, #tpu.memory_space<vmem>>, vector<1x128x32xf32>
    %5 = vector.shape_cast %4 : vector<1x128x32xf32> to vector<128x32xf32>
    %c0_5 = arith.constant 0 : index
    %c0_6 = arith.constant 0 : index
    %c0_7 = arith.constant 0 : index
    %6 = vector.load %arg4[%c0_5, %c0_6, %c0_7] : memref<1x128x32xf32, #tpu.memory_space<vmem>>, vector<1x128x32xf32>
    %7 = vector.shape_cast %6 : vector<1x128x32xf32> to vector<128x32xf32>
    %cst_8 = arith.constant dense<0.000000e+00> : vector<8x128xf32>
    %8 = tpu.matmul %3, %5, %cst_8 {dimension_numbers = #tpu.dot_dimension_numbers<[1], [1], [0], [0], [0, 0, 1, 0], [], []>} : vector<8x32xf32>, vector<128x32xf32>, vector<8x128xf32> -> vector<8x128xf32>
    %9 = tpu.iota {dimensions = array<i32: 1>} : vector<8x128xi32>
    %c8_i32 = arith.constant 8 : i32
    %10 = vector.broadcast %c8_i32 : i32 to vector<8x128xi32>
    %11 = arith.cmpi slt, %9, %10 : vector<8x128xi32>
    %cst_9 = arith.constant -1.000000e+30 : f32
    %12 = vector.broadcast %cst_9 : f32 to vector<8x128xf32>
    %13 = arith.select %11, %8, %12 : vector<8x128xi1>, vector<8x128xf32>
    %cst_10 = arith.constant dense<0xFF800000> : vector<8xf32>
    %14 = vector.multi_reduction <maximumf>, %13, %cst_10 [1] : vector<8x128xf32> to vector<8xf32>
    %15 = vector.shape_cast %14 : vector<8xf32> to vector<8x1xf32>
    %16 = vector.broadcast %15 : vector<8x1xf32> to vector<8x128xf32>
    %17 = arith.subf %13, %16 : vector<8x128xf32>
    %18 = math.exp %17 : vector<8x128xf32>
    %cst_11 = arith.constant dense<0.000000e+00> : vector<8xf32>
    %19 = vector.multi_reduction <add>, %18, %cst_11 [1] : vector<8x128xf32> to vector<8xf32>
    %20 = vector.shape_cast %19 : vector<8xf32> to vector<8x1xf32>
    %cst_12 = arith.constant 1.000000e+00 : f32
    %21 = vector.broadcast %cst_12 : f32 to vector<8x1xf32>
    %22 = arith.divf %21, %20 : vector<8x1xf32>
    %23 = vector.broadcast %22 : vector<8x1xf32> to vector<8x128xf32>
    %24 = arith.mulf %18, %23 : vector<8x128xf32>
    %25 = math.log %20 : vector<8x1xf32>
    %26 = vector.broadcast %25 : vector<8x1xf32> to vector<8x128xf32>
    %27 = arith.subf %17, %26 : vector<8x128xf32>
    %cst_13 = arith.constant dense<0.000000e+00> : vector<8x32xf32>
    %28 = tpu.matmul %24, %7, %cst_13 {dimension_numbers = #tpu.dot_dimension_numbers<[1], [0], [0], [1], [0, 0, 1, 1], [], []>} : vector<8x128xf32>, vector<128x32xf32>, vector<8x32xf32> -> vector<8x32xf32>
    %c0_14 = arith.constant 0 : index
    %c0_15 = arith.constant 0 : index
    %c0_16 = arith.constant 0 : index
    %29 = vector.load %arg5[%c0_14, %c0_15, %c0_16] : memref<1x8x32xf32, #tpu.memory_space<vmem>>, vector<1x8x32xf32>
    %30 = vector.shape_cast %29 : vector<1x8x32xf32> to vector<8x32xf32>
    %31 = vector.shape_cast %28 : vector<8x32xf32> to vector<1x8x32xf32>
    tpu.vector_store %arg5[%c0_14, %c0_15, %c0_16], %31 {strides = array<i32>} : memref<1x8x32xf32, #tpu.memory_space<vmem>>, vector<1x8x32xf32>,
    %c0_17 = arith.constant 0 : index
    %c0_18 = arith.constant 0 : index
    %c0_19 = arith.constant 0 : index
    %32 = vector.load %arg6[%c0_17, %c0_18, %c0_19] : memref<1x8x128xf32, #tpu.memory_space<vmem>>, vector<1x8x128xf32>
    %33 = vector.shape_cast %32 : vector<1x8x128xf32> to vector<8x128xf32>
    %34 = vector.shape_cast %24 : vector<8x128xf32> to vector<1x8x128xf32>
    tpu.vector_store %arg6[%c0_17, %c0_18, %c0_19], %34 {strides = array<i32>} : memref<1x8x128xf32, #tpu.memory_space<vmem>>, vector<1x8x128xf32>,
    %c0_20 = arith.constant 0 : index
    %c0_21 = arith.constant 0 : index
    %c0_22 = arith.constant 0 : index
    %35 = vector.load %arg7[%c0_20, %c0_21, %c0_22] : memref<1x8x128xf32, #tpu.memory_space<vmem>>, vector<1x8x128xf32>
    %36 = vector.shape_cast %35 : vector<1x8x128xf32> to vector<8x128xf32>
    %37 = vector.shape_cast %27 : vector<8x128xf32> to vector<1x8x128xf32>
    tpu.vector_store %arg7[%c0_20, %c0_21, %c0_22], %37 {strides = array<i32>} : memref<1x8x128xf32, #tpu.memory_space<vmem>>, vector<1x8x128xf32>,
    return
  }
  func.func @transform_0(%arg0: i32, %arg1: i32) -> (i32, i32, i32) {
    %c0_i32 = arith.constant 0 : i32
    %c0_i32_0 = arith.constant 0 : i32
    return %arg0, %arg1, %c0_i32 : i32, i32, i32
  }
  func.func @transform_1(%arg0: i32, %arg1: i32) -> (i32, i32, i32) {
    %c0_i32 = arith.constant 0 : i32
    %c0_i32_0 = arith.constant 0 : i32
    %c0_i32_1 = arith.constant 0 : i32
    return %arg0, %c0_i32, %c0_i32_0 : i32, i32, i32
  }
  func.func @transform_2(%arg0: i32, %arg1: i32) -> (i32, i32, i32) {
    %c0_i32 = arith.constant 0 : i32
    %c0_i32_0 = arith.constant 0 : i32
    %c0_i32_1 = arith.constant 0 : i32
    return %arg0, %c0_i32, %c0_i32_0 : i32, i32, i32
  }
  func.func @transform_3(%arg0: i32, %arg1: i32) -> (i32, i32, i32) {
    %c0_i32 = arith.constant 0 : i32
    %c0_i32_0 = arith.constant 0 : i32
    return %arg0, %arg1, %c0_i32 : i32, i32, i32
  }
  func.func @transform_4(%arg0: i32, %arg1: i32) -> (i32, i32, i32) {
    %c0_i32 = arith.constant 0 : i32
    %c0_i32_0 = arith.constant 0 : i32
    return %arg0, %arg1, %c0_i32 : i32, i32, i32
  }
  func.func @transform_5(%arg0: i32, %arg1: i32) -> (i32, i32, i32) {
    %c0_i32 = arith.constant 0 : i32
    %c0_i32_0 = arith.constant 0 : i32
    return %arg0, %arg1, %c0_i32 : i32, i32, i32
  }
}

</mosaic_0001>

<llo_original>
// kernel: tpu_custom_call.1
$region0: #{tpu_custom_call.1}
  #allocation0 [shape = 'u32[]', space=smem, size = 0x4, offset = 0x4, fixed_abs, tag = 'smem constant byte address 0x4 - core index']
  #allocation1 [shape = 'u32[144,128]{1,0:T(1,128)}', space=vmem, size = 0x12000, scoped, tag = 'internal scratch']
  %s0 = inlined_call_operand.vmem [shape: f32[2,8,32], index: 0, kind: input, shape index: {}]
  %s1 = inlined_call_operand.vmem [shape: f32[2,128,32], index: 1, kind: input, shape index: {}]
  %s2 = inlined_call_operand.vmem [shape: f32[2,128,32], index: 2, kind: input, shape index: {}]
  %s3 = inlined_call_operand.hbm [shape: f32[2,8,32], index: 3, kind: output, shape index: {0}]
  %s4 = inlined_call_operand.hbm [shape: f32[2,8,128], index: 4, kind: output, shape index: {1}]
  %s5 = inlined_call_operand.hbm [shape: f32[2,8,128], index: 5, kind: output, shape index: {2}]
  %6 = xla_tuple %s3, %s4, %s5
  %s7 = sld [smem:[#allocation0]]
  $region61: #{tpu_custom_call.1} parent=0
    _
  %s9 = ssub.s32 1, %s7
  %s10 = scalar_select 0, %s9, %s7
  $region1: #{tpu_custom_call.1} parent=0
    #allocation2 [shape = 'u8[8192]{0}', space=vmem, size = 0x2000, scoped, tag = 'output window, operand 0']
    #allocation3 [shape = 's32[2]{0}', space=sflag, size = 0x8, scoped, tag = 'scoped memory for tpu_custom_call.1']
    #allocation4 [shape = 'u8[8192]{0}', space=vmem, size = 0x2000, scoped, tag = 'output window, operand 1']
    #allocation5 [shape = 's32[2]{0}', space=sflag, size = 0x8, scoped, tag = 'scoped memory for tpu_custom_call.1']
    #allocation6 [shape = 'u8[8192]{0}', space=vmem, size = 0x2000, scoped, tag = 'output window, operand 2']
    %11 = vsyncpa [#allocation3], 0
    %s12 = scalar_lea.sflag [#allocation3], 1
    %13 = vsyncpa %s12, 0
    %14 = vsyncpa [#allocation5], 0
    %s15 = scalar_lea.sflag [#allocation5], 1
    %16 = vsyncpa %s15, 0
    loop: start=0, step=1, limit=4
    $region2: #{tpu_custom_call.1} parent=1 // loop_pre_header
      _
    $region3: #{tpu_custom_call.1} parent=1 // loop_header
      %s18 = sphi 0, %s22
      %p19 = scmp.ge.s32.totalorder %s18, 4
      %s25 = sphi 0, %s37
      %s26 = sphi 0, %s33
      %s27 = sphi 0, %s25
      %s28 = sphi 0, %s26
      %s29 = sphi 0, %s27
      %s30 = sphi 0, %s28
      %s42 = sphi 0, %s44
      %s45 = sphi 0, %s42
      %s46 = sphi 0, %s45
      %s62 = sphi 0, %s46
      %s68 = sphi 0, %s70
      %s71 = sphi 0, %s68
      %s72 = sphi 0, %s71
      %s88 = sphi 0, %s72
      %s94 = sphi 0, %s96
      %s97 = sphi 0, %s94
      %s98 = sphi 0, %s97
      %s114 = sphi 0, %s98
      %s122 = sphi 0, %s124
      %s125 = sphi 0, %s122
      %s126 = sphi 0, %s125
      %s142 = sphi 0, %s126
      %s150 = sphi 0, %s152
      %s153 = sphi 0, %s150
      %s154 = sphi 0, %s153
      %s170 = sphi 0, %s154
      %s178 = sphi 0, %s180
      %s181 = sphi 0, %s178
      %s182 = sphi 0, %s181
      %s198 = sphi 0, %s182
    $region4: #{tpu_custom_call.1} parent=1 // loop_header_branch
      %21 = sbr.rel (%p19) target = $region8
    $region5: #{tpu_custom_call.1} parent=1 // loop_body
      %s23 = ssub.s32 %s18, 1
      %s24 = ssub.s32 %s18, 2
      %s31 = sadd.s32 1, %s26
      %p32 = scmp.ge.s32.totalorder %s31, 1
      %s33 = scalar_select %p32, 0, %s31
      %s34 = sadd.s32 1, %s25
      %s35 = scalar_select %p32, %s34, %s25
      %p36 = scmp.ge.s32.totalorder %s35, 2
      %s37 = scalar_select %p36, 0, %s35
      %s38 = ssub.s32 %s25, %s37
      %s39 = ssub.s32 %s26, %s33
      %s40 = sor.u32 %s38, %s39
      %p41 = scmp.eq.s32.totalorder %s40, 0
      %s43 = sadd.s32 %s42, 1
      %s44 = scalar_select %p41, %s42, %s43
      %p47 = pneg %p41
      %p48 = scmp.eq.s32.totalorder %s18, 1
      %p49 = por %p47, %p48
      %p50 = scmp.ne.s32.totalorder %s42, %s45
      %p51 = scmp.eq.s32.totalorder %s18, 0
      %p52 = por %p50, %p51
      %p53 = scmp.ne.s32.totalorder %s42, %s45
      %p54 = scmp.eq.s32.totalorder %s23, 1
      %p55 = por %p53, %p54
      %p56 = scmp.ne.s32.totalorder %s45, %s46
      %p57 = scmp.eq.s32.totalorder %s23, 0
      %p58 = por %p56, %p57
      %p59 = scmp.ne.s32.totalorder %s45, %s46
      %p60 = scmp.eq.s32.totalorder %s24, 1
      %p61 = por %p59, %p60
      %p63 = scmp.ne.s32.totalorder %s46, %s62
      %p64 = scmp.eq.s32.totalorder %s24, 0
      %p65 = por %p63, %p64
      %s66 = ssub.s32 %s25, %s37
      %p67 = scmp.eq.s32.totalorder %s66, 0
      %s69 = sadd.s32 %s68, 1
      %s70 = scalar_select %p67, %s68, %s69
      %p73 = pneg %p67
      %p74 = scmp.eq.s32.totalorder %s18, 1
      %p75 = por %p73, %p74
      %p76 = scmp.ne.s32.totalorder %s68, %s71
      %p77 = scmp.eq.s32.totalorder %s18, 0
      %p78 = por %p76, %p77
      %p79 = scmp.ne.s32.totalorder %s68, %s71
      %p80 = scmp.eq.s32.totalorder %s23, 1
      %p81 = por %p79, %p80
      %p82 = scmp.ne.s32.totalorder %s71, %s72
      %p83 = scmp.eq.s32.totalorder %s23, 0
      %p84 = por %p82, %p83
      %p85 = scmp.ne.s32.totalorder %s71, %s72
      %p86 = scmp.eq.s32.totalorder %s24, 1
      %p87 = por %p85, %p86
      %p89 = scmp.ne.s32.totalorder %s72, %s88
      %p90 = scmp.eq.s32.totalorder %s24, 0
      %p91 = por %p89, %p90
      %s92 = ssub.s32 %s25, %s37
      %p93 = scmp.eq.s32.totalorder %s92, 0
      %s95 = sadd.s32 %s94, 1
      %s96 = scalar_select %p93, %s94, %s95
      %p99 = pneg %p93
      %p100 = scmp.eq.s32.totalorder %s18, 1
      %p101 = por %p99, %p100
      %p102 = scmp.ne.s32.totalorder %s94, %s97
      %p103 = scmp.eq.s32.totalorder %s18, 0
      %p104 = por %p102, %p103
      %p105 = scmp.ne.s32.totalorder %s94, %s97
      %p106 = scmp.eq.s32.totalorder %s23, 1
      %p107 = por %p105, %p106
      %p108 = scmp.ne.s32.totalorder %s97, %s98
      %p109 = scmp.eq.s32.totalorder %s23, 0
      %p110 = por %p108, %p109
      %p111 = scmp.ne.s32.totalorder %s97, %s98
      %p112 = scmp.eq.s32.totalorder %s24, 1
      %p113 = por %p111, %p112
      %p115 = scmp.ne.s32.totalorder %s98, %s114
      %p116 = scmp.eq.s32.totalorder %s24, 0
      %p117 = por %p115, %p116
      %s118 = ssub.s32 %s25, %s37
      %s119 = ssub.s32 %s26, %s33
      %s120 = sor.u32 %s118, %s119
      %p121 = scmp.eq.s32.totalorder %s120, 0
      %s123 = sadd.s32 %s122, 1
      %s124 = scalar_select %p121, %s122, %s123
      %p127 = pneg %p121
      %p128 = scmp.eq.s32.totalorder %s18, 1
      %p129 = por %p127, %p128
      %p130 = scmp.ne.s32.totalorder %s122, %s125
      %p131 = scmp.eq.s32.totalorder %s18, 0
      %p132 = por %p130, %p131
      %p133 = scmp.ne.s32.totalorder %s122, %s125
      %p134 = scmp.eq.s32.totalorder %s23, 1
      %p135 = por %p133, %p134
      %p136 = scmp.ne.s32.totalorder %s125, %s126
      %p137 = scmp.eq.s32.totalorder %s23, 0
      %p138 = por %p136, %p137
      %p139 = scmp.ne.s32.totalorder %s125, %s126
      %p140 = scmp.eq.s32.totalorder %s24, 1
      %p141 = por %p139, %p140
      %p143 = scmp.ne.s32.totalorder %s126, %s142
      %p144 = scmp.eq.s32.totalorder %s24, 0
      %p145 = por %p143, %p144
      %s146 = ssub.s32 %s25, %s37
      %s147 = ssub.s32 %s26, %s33
      %s148 = sor.u32 %s146, %s147
      %p149 = scmp.eq.s32.totalorder %s148, 0
      %s151 = sadd.s32 %s150, 1
      %s152 = scalar_select %p149, %s150, %s151
      %p155 = pneg %p149
      %p156 = scmp.eq.s32.totalorder %s18, 1
      %p157 = por %p155, %p156
      %p158 = scmp.ne.s32.totalorder %s150, %s153
      %p159 = scmp.eq.s32.totalorder %s18, 0
      %p160 = por %p158, %p159
      %p161 = scmp.ne.s32.totalorder %s150, %s153
      %p162 = scmp.eq.s32.totalorder %s23, 1
      %p163 = por %p161, %p162
      %p164 = scmp.ne.s32.totalorder %s153, %s154
      %p165 = scmp.eq.s32.totalorder %s23, 0
      %p166 = por %p164, %p165
      %p167 = scmp.ne.s32.totalorder %s153, %s154
      %p168 = scmp.eq.s32.totalorder %s24, 1
      %p169 = por %p167, %p168
      %p171 = scmp.ne.s32.totalorder %s154, %s170
      %p172 = scmp.eq.s32.totalorder %s24, 0
      %p173 = por %p171, %p172
      %s174 = ssub.s32 %s25, %s37
      %s175 = ssub.s32 %s26, %s33
      %s176 = sor.u32 %s174, %s175
      %p177 = scmp.eq.s32.totalorder %s176, 0
      %s179 = sadd.s32 %s178, 1
      %s180 = scalar_select %p177, %s178, %s179
      %p183 = pneg %p177
      %p184 = scmp.eq.s32.totalorder %s18, 1
      %p185 = por %p183, %p184
      %p186 = scmp.ne.s32.totalorder %s178, %s181
      %p187 = scmp.eq.s32.totalorder %s18, 0
      %p188 = por %p186, %p187
      %p189 = scmp.ne.s32.totalorder %s178, %s181
      %p190 = scmp.eq.s32.totalorder %s23, 1
      %p191 = por %p189, %p190
      %p192 = scmp.ne.s32.totalorder %s181, %s182
      %p193 = scmp.eq.s32.totalorder %s23, 0
      %p194 = por %p192, %p193
      %p195 = scmp.ne.s32.totalorder %s181, %s182
      %p196 = scmp.eq.s32.totalorder %s24, 1
      %p197 = por %p195, %p196
      %p199 = scmp.ne.s32.totalorder %s182, %s198
      %p200 = scmp.eq.s32.totalorder %s24, 0
      %p201 = por %p199, %p200
      %p202 = scmp.le.s32.totalorder 1, %s18
      %p203 = scmp.lt.s32.totalorder %s18, 3
      %p204 = pnand %p202, %p203
      %p205 = pneg %p204
      // Predicated region
      $region9: #{tpu_custom_call.1} parent=5 // pred_check
        _
      $region10: #{tpu_custom_call.1} parent=5 // pred_check_branch
        %207 = sbr.rel (%p204) target = $region12
      $region11: #{tpu_custom_call.1} parent=5 // pred_region
        %s208 = ssub.s32 %s18, 1
      $region12: #{tpu_custom_call.1} parent=5 // pred_fallthru
        _
      %p209 = scmp.lt.s32.totalorder %s18, 2
      // Predicated region
      $region13: #{tpu_custom_call.1} parent=5 // pred_check
        %p210 = pneg %p209
      $region14: #{tpu_custom_call.1} parent=5 // pred_check_branch
        %212 = sbr.rel (%p210) target = $region16
      $region15: #{tpu_custom_call.1} parent=5 // pred_region
        // Predicated region
        $region17: #{tpu_custom_call.1} parent=15 // pred_check
          %p213 = pneg %p52
        $region18: #{tpu_custom_call.1} parent=15 // pred_check_branch
          %215 = sbr.rel (%p213) target = $region20
        $region19: #{tpu_custom_call.1} parent=15 // pred_region
          %p216 = scmp.lt.s32.totalorder %s25, 1
          %s217 = scalar_select %p216, %s25, 1
          %p218 = scmp.lt.s32.totalorder %s26, 0
          %s219 = scalar_select %p218, %s26, 0
          %s220 = sadd.s32 %s219, %s217
          %s221 = smul.addr %s220, 8
          %s222 = scalar_lea.vmem %s0, %s221
        $region20: #{tpu_custom_call.1} parent=15 // pred_fallthru
          _
        // Predicated region
        $region21: #{tpu_custom_call.1} parent=15 // pred_check
          %p223 = pneg %p78
        $region22: #{tpu_custom_call.1} parent=15 // pred_check_branch
          %225 = sbr.rel (%p223) target = $region24
        $region23: #{tpu_custom_call.1} parent=15 // pred_region
          %p226 = scmp.lt.s32.totalorder %s25, 1
          %s227 = scalar_select %p226, %s25, 1
          %s228 = smul.addr %s227, 16
          %s229 = smul.addr %s228, 8
          %s230 = scalar_lea.vmem %s1, %s229
        $region24: #{tpu_custom_call.1} parent=15 // pred_fallthru
          _
        // Predicated region
        $region25: #{tpu_custom_call.1} parent=15 // pred_check
          %p231 = pneg %p104
        $region26: #{tpu_custom_call.1} parent=15 // pred_check_branch
          %233 = sbr.rel (%p231) target = $region28
        $region27: #{tpu_custom_call.1} parent=15 // pred_region
          %p234 = scmp.lt.s32.totalorder %s25, 1
          %s235 = scalar_select %p234, %s25, 1
          %s236 = smul.addr %s235, 16
          %s237 = smul.addr %s236, 8
          %s238 = scalar_lea.vmem %s2, %s237
        $region28: #{tpu_custom_call.1} parent=15 // pred_fallthru
          _
      $region16: #{tpu_custom_call.1} parent=5 // pred_fallthru
        _
      %p239 = scmp.le.s32.totalorder 1, %s18
      %p240 = scmp.lt.s32.totalorder %s18, 3
      %p241 = pnand %p239, %p240
      %p242 = pneg %p241
      // Predicated region
      $region29: #{tpu_custom_call.1} parent=5 // pred_check
        _
      $region30: #{tpu_custom_call.1} parent=5 // pred_check_branch
        %244 = sbr.rel (%p241) target = $region32
      $region31: #{tpu_custom_call.1} parent=5 // pred_region
        %s245 = ssub.s32 %s18, 1
        %p246 = scmp.lt.s32.totalorder %s27, 1
        %s247 = scalar_select %p246, %s27, 1
        %p248 = scmp.lt.s32.totalorder %s28, 0
        %s249 = scalar_select %p248, %s28, 0
        %s250 = sadd.s32 %s249, %s247
        %s251 = smul.addr %s250, 8
        %s252 = scalar_lea.vmem %s0, %s251
        %p253 = pneg %p58
        %p254 = pneg %p55
        %p255 = scmp.lt.s32.totalorder %s27, 1
        %s256 = scalar_select %p255, %s27, 1
        %s257 = smul.addr %s256, 16
        %s258 = smul.addr %s257, 8
        %s259 = scalar_lea.vmem %s1, %s258
        %p260 = pneg %p84
        %p261 = pneg %p81
        %p262 = scmp.lt.s32.totalorder %s27, 1
        %s263 = scalar_select %p262, %s27, 1
        %s264 = smul.addr %s263, 16
        %s265 = smul.addr %s264, 8
        %s266 = scalar_lea.vmem %s2, %s265
        %p267 = pneg %p110
        %p268 = pneg %p107
        %p269 = pneg %p138
        %p270 = pneg %p135
        %s271 = sand.u32 %s125, 1
        %s272 = scalar_lea.sflag [#allocation3], %s271
        %s273 = sand.u32 %s125, 1
        %s274 = smul.addr %s273, 8
        %s275 = scalar_lea.vmem [#allocation2], %s274
        %p276 = pneg %p166
        %p277 = pneg %p163
        %s278 = sand.u32 %s23, 1
        %s279 = scalar_lea.sflag [#allocation5], %s278
        %s280 = sand.u32 %s153, 1
        %s281 = smul.addr %s280, 8
        %s282 = scalar_lea.vmem [#allocation4], %s281
        %p283 = pneg %p194
        %p284 = pneg %p191
        %s285 = sand.u32 %s23, 1
        %s286 = scalar_lea.sflag [#allocation5], %s285
        %s287 = sand.u32 %s181, 1
        %s288 = smul.addr %s287, 8
        %s289 = scalar_lea.vmem [#allocation6], %s288
        %p290 = scmp.lt.s32.totalorder %s27, 1
        %s291 = scalar_select %p290, %s27, 1
        %p292 = scmp.lt.s32.totalorder %s28, 0
        %s293 = scalar_select %p292, %s28, 0
        %s294 = sadd.s32 %s293, %s291
        %s295 = smul.addr %s294, 8
        %s296 = scalar_lea.vmem %s0, %s295
        %p297 = scmp.lt.s32.totalorder %s27, 1
        %s298 = scalar_select %p297, %s27, 1
        %s299 = smul.addr %s298, 16
        %s300 = smul.addr %s299, 8
        %s301 = scalar_lea.vmem %s1, %s300
        %p302 = scmp.lt.s32.totalorder %s27, 1
        %s303 = scalar_select %p302, %s27, 1
        %s304 = smul.addr %s303, 16
        %s305 = smul.addr %s304, 8
        %s306 = scalar_lea.vmem %s2, %s305
        %v307 = vld [vmem:[%s296] sm:$0xff]
        %v308 = vmul.f32 %v307, 0.17677669
        %v309 = vld [vmem:[%s301] sm:$0xff]
        %v310 = vld [vmem:[%s301 + $0x8] sm:$0xff]
        %v311 = vld [vmem:[%s301 + $0x10] sm:$0xff]
        %v312 = vld [vmem:[%s301 + $0x18] sm:$0xff]
        %v313 = vld [vmem:[%s301 + $0x20] sm:$0xff]
        %v314 = vld [vmem:[%s301 + $0x28] sm:$0xff]
        %v315 = vld [vmem:[%s301 + $0x30] sm:$0xff]
        %v316 = vld [vmem:[%s301 + $0x38] sm:$0xff]
        %v317 = vld [vmem:[%s301 + $0x40] sm:$0xff]
        %v318 = vld [vmem:[%s301 + $0x48] sm:$0xff]
        %v319 = vld [vmem:[%s301 + $0x50] sm:$0xff]
        %v320 = vld [vmem:[%s301 + $0x58] sm:$0xff]
        %v321 = vld [vmem:[%s301 + $0x60] sm:$0xff]
        %v322 = vld [vmem:[%s301 + $0x68] sm:$0xff]
        %v323 = vld [vmem:[%s301 + $0x70] sm:$0xff]
        %v324 = vld [vmem:[%s301 + $0x78] sm:$0xff]
        %v325 = vld [vmem:[%s306] sm:$0xff]
        %v326 = vld [vmem:[%s306 + $0x8] sm:$0xff]
        %v327 = vld [vmem:[%s306 + $0x10] sm:$0xff]
        %v328 = vld [vmem:[%s306 + $0x18] sm:$0xff]
        %v329 = vld [vmem:[%s306 + $0x20] sm:$0xff]
        %v330 = vld [vmem:[%s306 + $0x28] sm:$0xff]
        %v331 = vld [vmem:[%s306 + $0x30] sm:$0xff]
        %v332 = vld [vmem:[%s306 + $0x38] sm:$0xff]
        %v333 = vld [vmem:[%s306 + $0x40] sm:$0xff]
        %v334 = vld [vmem:[%s306 + $0x48] sm:$0xff]
        %v335 = vld [vmem:[%s306 + $0x50] sm:$0xff]
        %v336 = vld [vmem:[%s306 + $0x58] sm:$0xff]
        %v337 = vld [vmem:[%s306 + $0x60] sm:$0xff]
        %v338 = vld [vmem:[%s306 + $0x68] sm:$0xff]
        %v339 = vld [vmem:[%s306 + $0x70] sm:$0xff]
        %v340 = vld [vmem:[%s306 + $0x78] sm:$0xff]
        %vm341 = vcmask 261120
        %v343 = vsel %vm341, %v308, 0
        %v346 = vsel %vm341, %v309, 0
        %v349 = vsel %vm341, %v310, 0
        %v352 = vsel %vm341, %v311, 0
        %v355 = vsel %vm341, %v312, 0
        %v358 = vsel %vm341, %v313, 0
        %v361 = vsel %vm341, %v314, 0
        %v364 = vsel %vm341, %v315, 0
        %v367 = vsel %vm341, %v316, 0
        %v370 = vsel %vm341, %v317, 0
        %v373 = vsel %vm341, %v318, 0
        %v376 = vsel %vm341, %v319, 0
        %v379 = vsel %vm341, %v320, 0
        %v382 = vsel %vm341, %v321, 0
        %v385 = vsel %vm341, %v322, 0
        %v388 = vsel %vm341, %v323, 0
        %v391 = vsel %vm341, %v324, 0
        %393 = vmatprep.subr.mxu0 0.0
        %394 = vmatpush1.xpose.msra.mxu0 %v346
        %395 = vmatprep.subr.mxu0 0.0
        %396 = vmatpush1.xpose.msra.mxu0 %v349
        %397 = vmatprep.subr.mxu0 0.0
        %398 = vmatpush1.xpose.msra.mxu0 %v352
        %399 = vmatprep.subr.mxu0 0.0
        %400 = vmatpush1.xpose.msra.mxu0 %v355
        %401 = vmatprep.subr.mxu0 0.0
        %402 = vmatpush1.xpose.msra.mxu0 %v358
        %403 = vmatprep.subr.mxu0 0.0
        %404 = vmatpush1.xpose.msra.mxu0 %v361
        %405 = vmatprep.subr.mxu0 0.0
        %406 = vmatpush1.xpose.msra.mxu0 %v364
        %407 = vmatprep.subr.mxu0 0.0
        %408 = vmatpush1.xpose.msra.mxu0 %v367
        %409 = vmatprep.subr.mxu0 0.0
        %410 = vmatpush1.xpose.msra.mxu0 %v370
        %411 = vmatprep.subr.mxu0 0.0
        %412 = vmatpush1.xpose.msra.mxu0 %v373
        %413 = vmatprep.subr.mxu0 0.0
        %414 = vmatpush1.xpose.msra.mxu0 %v376
        %415 = vmatprep.subr.mxu0 0.0
        %416 = vmatpush1.xpose.msra.mxu0 %v379
        %417 = vmatprep.subr.mxu0 0.0
        %418 = vmatpush1.xpose.msra.mxu0 %v382
        %419 = vmatprep.subr.mxu0 0.0
        %420 = vmatpush1.xpose.msra.mxu0 %v385
        %421 = vmatprep.subr.mxu0 0.0
        %422 = vmatpush1.xpose.msra.mxu0 %v388
        %423 = vmatprep.subr.mxu0 0.0
        %424 = vmatpush1.xpose.msra.mxu0 %v391
        %425 = vmatprep.subr.mxu0 0.0
        %426 = vmatpush1.xpose.msra.mxu0 0.0
        %427 = vmatprep.subr.mxu0 0.0
        %428 = vmatpush1.xpose.msra.mxu0 0.0
        %429 = vmatprep.subr.mxu0 0.0
        %430 = vmatpush1.xpose.msra.mxu0 0.0
        %431 = vmatprep.subr.mxu0 0.0
        %432 = vmatpush1.xpose.msra.mxu0 0.0
        %433 = vmatprep.subr.mxu0 0.0
        %434 = vmatpush1.xpose.msra.mxu0 0.0
        %435 = vmatprep.subr.mxu0 0.0
        %436 = vmatpush1.xpose.msra.mxu0 0.0
        %437 = vmatprep.subr.mxu0 0.0
        %438 = vmatpush1.xpose.msra.mxu0 0.0
        %439 = vmatprep.subr.mxu0 0.0
        %440 = vmatpush1.xpose.msra.mxu0 0.0
        %441 = vmatprep.subr.mxu0 0.0
        %442 = vmatpush1.xpose.msra.mxu0 0.0
        %443 = vmatprep.subr.mxu0 0.0
        %444 = vmatpush1.xpose.msra.mxu0 0.0
        %445 = vmatprep.subr.mxu0 0.0
        %446 = vmatpush1.xpose.msra.mxu0 0.0
        %447 = vmatprep.subr.mxu0 0.0
        %448 = vmatpush1.xpose.msra.mxu0 0.0
        %449 = vmatprep.subr.mxu0 0.0
        %450 = vmatpush1.xpose.msra.mxu0 0.0
        %451 = vmatprep.subr.mxu0 0.0
        %452 = vmatpush1.xpose.msra.mxu0 0.0
        %453 = vmatprep.subr.mxu0 0.0
        %454 = vmatpush1.xpose.msra.mxu0 0.0
        %455 = vmatprep.subr.mxu0 0.0
        %456 = vmatpush1.xpose.msra.mxu0 0.0
        %457 = vmatprep.mubr.f32.mxu0 0.0
        %458 = vmatmul.mubr.f32.gmra.mrb[0].mxu0 %v343
        %v459 = vpop.f32.mrb[0].mxu0
        %v460 = vadd.f32 0.0, %v459
        %v461 = vpop.f32.mrb[0].mxu0
        %462 = vdwg.mxu0
        %v463 = vlaneseq
        %v464 = vand.u32 %v463, 127
        %vm465 = vcmp.lt.s32.totalorder %v464, 8
        %v466 = vsel %vm465, %v460, -1e+30
        %467 = vmax.xlane.f32.xlu0 %v466
        %v468 = vpop.xlane.xlu0 %467
        %v469 = vsub.f32 %v466, %v468
        %v470 = vmul.f32 %v469, 1.442695
        %v471 = vpow.pop %v470
        %472 = vadd.xlane.f32.xlu0 %v471
        %v473 = vpop.xlane.xlu0 %472
        %v474 = vrcp.pop %v473
        %v475 = vmul.f32 1.0, %v474
        %v476 = vmul.f32 %v471, %v475
        %v477 = vlog2.pop %v473
        %v478 = vmul.f32 %v477, 0.6931472
        %v479 = vsub.f32 %v469, %v478
        %480 = vmatprep.subr.mxu0 0.0
        %481 = vmatpush1.msra.mxu0 %v325
        %482 = vmatprep.subr.mxu0 0.0
        %483 = vmatpush1.msra.mxu0 %v326
        %484 = vmatprep.subr.mxu0 0.0
        %485 = vmatpush1.msra.mxu0 %v327
        %486 = vmatprep.subr.mxu0 0.0
        %487 = vmatpush1.msra.mxu0 %v328
        %488 = vmatprep.subr.mxu0 0.0
        %489 = vmatpush1.msra.mxu0 %v329
        %490 = vmatprep.subr.mxu0 0.0
        %491 = vmatpush1.msra.mxu0 %v330
        %492 = vmatprep.subr.mxu0 0.0
        %493 = vmatpush1.msra.mxu0 %v331
        %494 = vmatprep.subr.mxu0 0.0
        %495 = vmatpush1.msra.mxu0 %v332
        %496 = vmatprep.subr.mxu0 0.0
        %497 = vmatpush1.msra.mxu0 %v333
        %498 = vmatprep.subr.mxu0 0.0
        %499 = vmatpush1.msra.mxu0 %v334
        %500 = vmatprep.subr.mxu0 0.0
        %501 = vmatpush1.msra.mxu0 %v335
        %502 = vmatprep.subr.mxu0 0.0
        %503 = vmatpush1.msra.mxu0 %v336
        %504 = vmatprep.subr.mxu0 0.0
        %505 = vmatpush1.msra.mxu0 %v337
        %506 = vmatprep.subr.mxu0 0.0
        %507 = vmatpush1.msra.mxu0 %v338
        %508 = vmatprep.subr.mxu0 0.0
        %509 = vmatpush1.msra.mxu0 %v339
        %510 = vmatprep.subr.mxu0 0.0
        %511 = vmatpush1.msra.mxu0 %v340
        %512 = vmatprep.subr.mxu0 0.0
        %513 = vmatpush1.msra.mxu0 0.0
        %514 = vmatprep.subr.mxu0 0.0
        %515 = vmatpush1.msra.mxu0 0.0
        %516 = vmatprep.subr.mxu0 0.0
        %517 = vmatpush1.msra.mxu0 0.0
        %518 = vmatprep.subr.mxu0 0.0
        %519 = vmatpush1.msra.mxu0 0.0
        %520 = vmatprep.subr.mxu0 0.0
        %521 = vmatpush1.msra.mxu0 0.0
        %522 = vmatprep.subr.mxu0 0.0
        %523 = vmatpush1.msra.mxu0 0.0
        %524 = vmatprep.subr.mxu0 0.0
        %525 = vmatpush1.msra.mxu0 0.0
        %526 = vmatprep.subr.mxu0 0.0
        %527 = vmatpush1.msra.mxu0 0.0
        %528 = vmatprep.subr.mxu0 0.0
        %529 = vmatpush1.msra.mxu0 0.0
        %530 = vmatprep.subr.mxu0 0.0
        %531 = vmatpush1.msra.mxu0 0.0
        %532 = vmatprep.subr.mxu0 0.0
        %533 = vmatpush1.msra.mxu0 0.0
        %534 = vmatprep.subr.mxu0 0.0
        %535 = vmatpush1.msra.mxu0 0.0
        %536 = vmatprep.subr.mxu0 0.0
        %537 = vmatpush1.msra.mxu0 0.0
        %538 = vmatprep.subr.mxu0 0.0
        %539 = vmatpush1.msra.mxu0 0.0
        %540 = vmatprep.subr.mxu0 0.0
        %541 = vmatpush1.msra.mxu0 0.0
        %542 = vmatprep.subr.mxu0 0.0
        %543 = vmatpush1.msra.mxu0 0.0
        %544 = vmatprep.mubr.f32.mxu0 0.0
        %545 = vmatmul.mubr.f32.gmra.mrb[0].mxu0 %v476
        %v546 = vpop.f32.mrb[0].mxu0
        %v547 = vadd.f32 0.0, %v546
        %v548 = vpop.f32.mrb[0].mxu0
        %549 = vdwg.mxu0
        %550 = vst.msk [vmem:[%s275] sm:$0xff] %vm341, %v547
        %551 = vst [vmem:[%s282] sm:$0xff] %v476
        %552 = vst [vmem:[%s289] sm:$0xff] %v479
        %s553 = sand.u32 %s125, 1
        %s554 = scalar_lea.sflag [#allocation3], %s553
        %s555 = sand.u32 %s125, 1
        %s556 = smul.addr %s555, 8
        %s557 = scalar_lea.vmem [#allocation2], %s556
        %s558 = sand.u32 %s23, 1
        %s559 = scalar_lea.sflag [#allocation5], %s558
        %s560 = sand.u32 %s153, 1
        %s561 = smul.addr %s560, 8
        %s562 = scalar_lea.vmem [#allocation4], %s561
        %s563 = sand.u32 %s23, 1
        %s564 = scalar_lea.sflag [#allocation5], %s563
        %s565 = sand.u32 %s181, 1
        %s566 = smul.addr %s565, 8
        %s567 = scalar_lea.vmem [#allocation6], %s566
        // Predicated region
        $region33: #{tpu_custom_call.1} parent=31 // pred_check
          %p568 = pneg %p135
        $region34: #{tpu_custom_call.1} parent=31 // pred_check_branch
          %570 = sbr.rel (%p568) target = $region36
        $region35: #{tpu_custom_call.1} parent=31 // pred_region
          %s572 = ssub.s32 128, 128
          %573 = vsyncadd %s554, %s572
          %s574 = sadd.s32 %s28, %s27
          %s575 = smul.addr %s574, 128
          %s576 = scalar_lea.hbm %s3, %s575
          %s578 = sshll.u32 %s557, 4
          %s579 = int_to_ptr.vmem [resolvable:$true] %s578
          %581 = dma.vmem_to_hbm [thread:$0]  %s579, 128, %s576, %s554
        $region36: #{tpu_custom_call.1} parent=31 // pred_fallthru
          _
        // Predicated region
        $region37: #{tpu_custom_call.1} parent=31 // pred_check
          %p582 = pneg %p163
        $region38: #{tpu_custom_call.1} parent=31 // pred_check_branch
          %584 = sbr.rel (%p582) target = $region40
        $region39: #{tpu_custom_call.1} parent=31 // pred_region
          %s586 = ssub.s32 128, 128
          %587 = vsyncadd %s559, %s586
          %s588 = sadd.s32 %s28, %s27
          %s589 = smul.addr %s588, 128
          %s590 = scalar_lea.hbm %s4, %s589
          %s592 = sshll.u32 %s562, 4
          %s593 = int_to_ptr.vmem [resolvable:$true] %s592
          %595 = dma.vmem_to_hbm [thread:$0]  %s593, 128, %s590, %s559
        $region40: #{tpu_custom_call.1} parent=31 // pred_fallthru
          _
        // Predicated region
        $region41: #{tpu_custom_call.1} parent=31 // pred_check
          %p596 = pneg %p191
        $region42: #{tpu_custom_call.1} parent=31 // pred_check_branch
          %598 = sbr.rel (%p596) target = $region44
        $region43: #{tpu_custom_call.1} parent=31 // pred_region
          %s600 = ssub.s32 128, 128
          %601 = vsyncadd %s564, %s600
          %s602 = sadd.s32 %s28, %s27
          %s603 = smul.addr %s602, 128
          %s604 = scalar_lea.hbm %s5, %s603
          %s606 = sshll.u32 %s567, 4
          %s607 = int_to_ptr.vmem [resolvable:$true] %s606
          %609 = dma.vmem_to_hbm [thread:$0]  %s607, 128, %s604, %s564
        $region44: #{tpu_custom_call.1} parent=31 // pred_fallthru
          _
      $region32: #{tpu_custom_call.1} parent=5 // pred_fallthru
        _
      %p610 = scmp.le.s32.totalorder 2, %s18
      // Predicated region
      $region45: #{tpu_custom_call.1} parent=5 // pred_check
        %p611 = pneg %p610
      $region46: #{tpu_custom_call.1} parent=5 // pred_check_branch
        %613 = sbr.rel (%p611) target = $region48
      $region47: #{tpu_custom_call.1} parent=5 // pred_region
        %s614 = ssub.s32 %s18, 2
        // Predicated region
        $region49: #{tpu_custom_call.1} parent=47 // pred_check
          %p615 = pneg %p141
        $region50: #{tpu_custom_call.1} parent=47 // pred_check_branch
          %617 = sbr.rel (%p615) target = $region52
        $region51: #{tpu_custom_call.1} parent=47 // pred_region
          %s618 = sand.u32 %s126, 1
          %s619 = scalar_lea.sflag [#allocation3], %s618
          %s620 = sand.u32 %s126, 1
          %s621 = smul.addr %s620, 8
          %s622 = scalar_lea.vmem [#allocation2], %s621
          %623 = dma.done %s619, 128
        $region52: #{tpu_custom_call.1} parent=47 // pred_fallthru
          _
        // Predicated region
        $region53: #{tpu_custom_call.1} parent=47 // pred_check
          %p624 = pneg %p169
        $region54: #{tpu_custom_call.1} parent=47 // pred_check_branch
          %626 = sbr.rel (%p624) target = $region56
        $region55: #{tpu_custom_call.1} parent=47 // pred_region
          %s627 = sand.u32 %s24, 1
          %s628 = scalar_lea.sflag [#allocation5], %s627
          %s629 = sand.u32 %s154, 1
          %s630 = smul.addr %s629, 8
          %s631 = scalar_lea.vmem [#allocation4], %s630
          %632 = dma.done %s628, 128
        $region56: #{tpu_custom_call.1} parent=47 // pred_fallthru
          _
        // Predicated region
        $region57: #{tpu_custom_call.1} parent=47 // pred_check
          %p633 = pneg %p197
        $region58: #{tpu_custom_call.1} parent=47 // pred_check_branch
          %635 = sbr.rel (%p633) target = $region60
        $region59: #{tpu_custom_call.1} parent=47 // pred_region
          %s636 = sand.u32 %s24, 1
          %s637 = scalar_lea.sflag [#allocation5], %s636
          %s638 = sand.u32 %s182, 1
          %s639 = smul.addr %s638, 8
          %s640 = scalar_lea.vmem [#allocation6], %s639
          %641 = dma.done %s637, 128
        $region60: #{tpu_custom_call.1} parent=47 // pred_fallthru
          _
      $region48: #{tpu_custom_call.1} parent=5 // pred_fallthru
        _
    $region6: #{tpu_custom_call.1} parent=1 // loop_footer
      %s22 = sadd.s32 1, %s18
    $region7: #{tpu_custom_call.1} parent=1 // loop_footer_branch
      %17 = sbr.rel target = $region3
    $region8: #{tpu_custom_call.1} parent=1 // loop_exit
      _
    %642 = vsyncpa [#allocation3], 1
    %s643 = scalar_lea.sflag [#allocation3], 1
    %644 = vsyncpa %s643, 1
    %645 = vsyncpa [#allocation5], 1
    %s646 = scalar_lea.sflag [#allocation5], 1
    %647 = vsyncpa %s646, 1

</llo_original>
